<compile_context>
chip_gen: v7x
topology: tpu7x:2x2x1
jax: 0.10.0
libtpu: 0.0.40
codegen_flags: <defaults>
</compile_context>

<pallas_src>
import functools

import jax
import jax.numpy as jnp
from jax.experimental import pallas as pl
from jax.experimental.pallas import tpu as pltpu


_MAX_TILE = 2048     # rows per grid step (multiple of 256); safe on v5e/v6e/v7x
_MIN_GRID = 4        # aim for >=4 grid steps so both v7x TensorCores get work


def _round_up(v, m):
    return ((v + m - 1) // m) * m


def _choose_tile(n):
    if n <= 512:
        return max(8, _round_up(n, 8))
    return min(_round_up(pl.cdiv(n, _MIN_GRID), 256), _MAX_TILE)


# ----------------------------- Pallas kernel --------------------------------
def _mlp_kernel(x_ref, idx_ref,
                w1x_ref, tp_ref, tbh_ref, b1_ref,
                w2_ref, b2_ref, w3_ref, b3_ref,
                o_ref):
    x = x_ref[...]                       # (tile, 64) f32: matmul operand + residual
    cd = w1x_ref.dtype                   # compute dtype (f32 or bf16)
    tile = x.shape[0]

    # --- fc1 with the concat + embedding gathers fused away ------------------
    h1 = jnp.dot(x.astype(cd), w1x_ref[...], preferred_element_type=jnp.float32)

    idx = idx_ref[...]                   # (tile, 2) int32: [p, b*num_heads + h]
    p_idx = idx[:, 0:1]
    bh_idx = idx[:, 1:2]
    n_p = tp_ref.shape[0]
    n_bh = tbh_ref.shape[0]
    onehot_p = (jax.lax.broadcasted_iota(jnp.int32, (tile, n_p), 1)
                == p_idx).astype(cd)
    onehot_bh = (jax.lax.broadcasted_iota(jnp.int32, (tile, n_bh), 1)
                 == bh_idx).astype(cd)
    h1 = h1 + jnp.dot(onehot_p, tp_ref[...], preferred_element_type=jnp.float32)
    h1 = h1 + jnp.dot(onehot_bh, tbh_ref[...], preferred_element_type=jnp.float32)
    h1 = jnp.maximum(h1 + b1_ref[...], 0.0)          # bias + relu in f32

    # --- fc2 + relu -----------------------------------------------------------
    h2 = jnp.dot(h1.astype(cd), w2_ref[...], preferred_element_type=jnp.float32)
    h2 = jnp.maximum(h2 + b2_ref[...], 0.0)

    # --- fc3 + residual (x tile already resident in VMEM, exact f32) ----------
    h3 = jnp.dot(h2.astype(cd), w3_ref[...], preferred_element_type=jnp.float32)
    o_ref[...] = (h3 + b3_ref[...] + x).astype(o_ref.dtype)


def mlp_forward(x, idx, w1x, table_p, table_bh, b1, w2, b2, w3, b3):
    n = x.shape[0]
    tile = _choose_tile(n)
    grid = (pl.cdiv(n, tile),)

    def batch_spec(feat):
        return pl.BlockSpec((tile, feat), lambda i: (i, 0))

    def resident_spec(arr):
        return pl.BlockSpec(arr.shape, lambda i: (0, 0))

    in_specs = [
        batch_spec(x.shape[1]),          # x    [tile, 64]
        batch_spec(idx.shape[1]),        # idx  [tile, 2]
        resident_spec(w1x), resident_spec(table_p), resident_spec(table_bh),
        resident_spec(b1),
        resident_spec(w2), resident_spec(b2),
        resident_spec(w3), resident_spec(b3),
    ]
    out_specs = batch_spec(64)

    return pl.pallas_call(
        _mlp_kernel,
        out_shape=jax.ShapeDtypeStruct((n, 64), jnp.float32),
        grid=grid,
        in_specs=in_specs,
        out_specs=out_specs,
        compiler_params=pltpu.CompilerParams(
            dimension_semantics=("parallel",),      # shard batch axis over TCs
            vmem_limit_bytes=48 * 1024 * 1024,      # <= v7x's 64 MiB physical
        ),
    )(x, idx, w1x, table_p, table_bh, b1, w2, b2, w3, b3)


# --------------------------- Model parameters --------------------------------
def init_params(key,
                num_pos=256, num_blocks=6, num_heads=12,
                emb_pos_dim=32, emb_blocks_dim=4, emb_heads_dim=8,
                l1=128, l2=128):
    in_dim = 64 + emb_pos_dim + emb_blocks_dim + emb_heads_dim  # 108
    keys = jax.random.split(key, 9)
    return {
        "emb_pos":    jax.random.normal(keys[0], (num_pos, emb_pos_dim), jnp.float32),
        "emb_blocks": jax.random.normal(keys[1], (num_blocks, emb_blocks_dim), jnp.float32),
        "emb_heads":  jax.random.normal(keys[2], (num_heads, emb_heads_dim), jnp.float32),
        # Linear weights stored [in, out]; scale ~ 1/sqrt(in) like torch default.
        "w1": jax.random.normal(keys[3], (in_dim, l1), jnp.float32) / jnp.sqrt(in_dim),
        "b1": jax.random.normal(keys[4], (1, l1), jnp.float32) * 0.01,
        "w2": jax.random.normal(keys[5], (l1, l2), jnp.float32) / jnp.sqrt(l1),
        "b2": jax.random.normal(keys[6], (1, l2), jnp.float32) * 0.01,
        "w3": jax.random.normal(keys[7], (l2, 64), jnp.float32) / jnp.sqrt(l2),
        "b3": jax.random.normal(keys[8], (1, 64), jnp.float32) * 0.01,
    }


# ------------------------------ Forward pass ---------------------------------
@functools.partial(jax.jit, static_argnames=("compute_dtype",))
def neural_network_forward(params, x, p, b, h, compute_dtype=jnp.float32):
    emb_pos = params["emb_pos"]
    emb_blocks = params["emb_blocks"]
    emb_heads = params["emb_heads"]
    dx = x.shape[1]                      # 64
    dp = emb_pos.shape[1]                # 32
    db = emb_blocks.shape[1]             # 4
    num_heads = emb_heads.shape[0]       # 12

    w1 = params["w1"]
    w1x = w1[:dx]                                        # [64, 128]
    w1p = w1[dx:dx + dp]                                 # [32, 128]
    w1b = w1[dx + dp:dx + dp + db]                       # [4, 128]
    w1h = w1[dx + dp + db:]                              # [8, 128]

    # Fold the embedding tables into fc1 so the per-row gathers become exact
    # one-hot row selections inside the kernel (no gathered [N,44] pass in HBM).
    table_p = emb_pos @ w1p                              # [256, 128] f32
    tb = emb_blocks @ w1b                                # [6, 128]
    th = emb_heads @ w1h                                 # [12, 128]
    table_bh = (tb[:, None, :] + th[None, :, :]).reshape(-1, tb.shape[1])  # [72,128]
    # Pad to a multiple of 16 sublanes (clean bf16 tiling); padded rows are
    # never selected because bh indices are < num_blocks * num_heads.
    pad = (-table_bh.shape[0]) % 16
    if pad:
        table_bh = jnp.concatenate(
            [table_bh, jnp.zeros((pad, table_bh.shape[1]), table_bh.dtype)], axis=0)

    idx = jnp.stack([p.astype(jnp.int32),
                     b.astype(jnp.int32) * num_heads + h.astype(jnp.int32)],
                    axis=1)                              # [N, 2] int32

    cd = compute_dtype
    return mlp_forward(
        x.astype(jnp.float32), idx,
        w1x.astype(cd), table_p.astype(cd), table_bh.astype(cd),
        params["b1"].astype(jnp.float32),
        params["w2"].astype(cd), params["b2"].astype(jnp.float32),
        params["w3"].astype(cd), params["b3"].astype(jnp.float32))


# Pure-JAX reference for correctness check
def reference_forward(params, x, p, b, h):
    p_emb = jnp.take(params["emb_pos"], p, axis=0)
    b_emb = jnp.take(params["emb_blocks"], b, axis=0)
    h_emb = jnp.take(params["emb_heads"], h, axis=0)
    z = jnp.concatenate([x, p_emb, b_emb, h_emb], axis=1)
    z = jnp.maximum(z @ params["w1"] + params["b1"], 0.0)
    z = jnp.maximum(z @ params["w2"] + params["b2"], 0.0)
    return z @ params["w3"] + params["b3"] + x


if __name__ == "__main__":
    key = jax.random.PRNGKey(0)
    k_param, k_data = jax.random.split(key, 2)
    params = init_params(k_param)

    # N=16: single small tile.  N=640: multi-step grid (tile=256, grid=3) with
    # a partial last block, exercising edge masking and megacore sharding.
    for N in (16, 640):
        kx, kp, kb, kh = jax.random.split(jax.random.fold_in(k_data, N), 4)
        x = jax.random.normal(kx, (N, 64), jnp.float32)
        p = jax.random.randint(kp, (N,), 0, 256, dtype=jnp.int32)
        b = jax.random.randint(kb, (N,), 0, 6, dtype=jnp.int32)
        h = jax.random.randint(kh, (N,), 0, 12, dtype=jnp.int32)

        ref = jax.block_until_ready(reference_forward(params, x, p, b, h))

        # f32 path: matches reference up to fp reassociation.
        out = jax.block_until_ready(neural_network_forward(params, x, p, b, h))
        assert out.shape == (N, 64)
        assert jnp.allclose(out, ref, atol=1e-3, rtol=1e-3), \
            f"f32 mismatch vs reference (N={N})"

        # bf16 compute path (bandwidth optimization on v6e/v7x): loose tolerance,
        # residual stays exact f32.
        out_bf16 = jax.block_until_ready(
            neural_network_forward(params, x, p, b, h, compute_dtype=jnp.bfloat16))
        assert out_bf16.shape == (N, 64)
        assert jnp.allclose(out_bf16, ref, atol=1e-1, rtol=1e-1), \
            f"bf16 mismatch vs reference (N={N})"

    print("KERNEL_OK")
</pallas_src>

<mosaic_0001>
module attributes {stable_mosaic.version = 11 : i64} {
  func.func @_mlp_kernel(%arg0: i32, %arg1: memref<16x64xf32, #tpu.memory_space<vmem>>, %arg2: memref<16x2xi32, #tpu.memory_space<vmem>>, %arg3: memref<64x128xf32, #tpu.memory_space<vmem>>, %arg4: memref<256x128xf32, #tpu.memory_space<vmem>>, %arg5: memref<80x128xf32, #tpu.memory_space<vmem>>, %arg6: memref<1x128xf32, #tpu.memory_space<vmem>>, %arg7: memref<128x128xf32, #tpu.memory_space<vmem>>, %arg8: memref<1x128xf32, #tpu.memory_space<vmem>>, %arg9: memref<128x64xf32, #tpu.memory_space<vmem>>, %arg10: memref<1x64xf32, #tpu.memory_space<vmem>>, %arg11: memref<16x64xf32, #tpu.memory_space<vmem>>) attributes {dimension_semantics = [#tpu.dimension_semantics<parallel>], iteration_bounds = array<i64: 1>, scalar_prefetch = 0 : i64, scratch_operands = 0 : i64, tpu.core_type = #tpu.core_type<tc>, window_params = [{transform_indices = @transform_0, window_bounds = array<i64: 16, 64>}, {transform_indices = @transform_1, window_bounds = array<i64: 16, 2>}, {pipeline_mode = #tpu.pipeline_mode<synchronous>, transform_indices = @transform_2, window_bounds = array<i64: 64, 128>}, {pipeline_mode = #tpu.pipeline_mode<synchronous>, transform_indices = @transform_3, window_bounds = array<i64: 256, 128>}, {pipeline_mode = #tpu.pipeline_mode<synchronous>, transform_indices = @transform_4, window_bounds = array<i64: 80, 128>}, {pipeline_mode = #tpu.pipeline_mode<synchronous>, transform_indices = @transform_5, window_bounds = array<i64: 1, 128>}, {pipeline_mode = #tpu.pipeline_mode<synchronous>, transform_indices = @transform_6, window_bounds = array<i64: 128, 128>}, {pipeline_mode = #tpu.pipeline_mode<synchronous>, transform_indices = @transform_7, window_bounds = array<i64: 1, 128>}, {pipeline_mode = #tpu.pipeline_mode<synchronous>, transform_indices = @transform_8, window_bounds = array<i64: 128, 64>}, {pipeline_mode = #tpu.pipeline_mode<synchronous>, transform_indices = @transform_9, window_bounds = array<i64: 1, 64>}, {transform_indices = @transform_10, window_bounds = array<i64: 16, 64>}]} {
    %c0 = arith.constant 0 : index
    %c0_0 = arith.constant 0 : index
    %0 = vector.load %arg1[%c0, %c0_0] : memref<16x64xf32, #tpu.memory_space<vmem>>, vector<16x64xf32>
    %c0_1 = arith.constant 0 : index
    %c0_2 = arith.constant 0 : index
    %1 = vector.load %arg3[%c0_1, %c0_2] : memref<64x128xf32, #tpu.memory_space<vmem>>, vector<64x128xf32>
    %cst = arith.constant dense<0.000000e+00> : vector<16x128xf32>
    %2 = tpu.matmul %0, %1, %cst {dimension_numbers = #tpu.dot_dimension_numbers<[1], [0], [0], [1], [0, 0, 1, 1], [], []>} : vector<16x64xf32>, vector<64x128xf32>, vector<16x128xf32> -> vector<16x128xf32>
    %c0_3 = arith.constant 0 : index
    %c0_4 = arith.constant 0 : index
    %3 = vector.load %arg2[%c0_3, %c0_4] : memref<16x2xi32, #tpu.memory_space<vmem>>, vector<16x2xi32>
    %4 = vector.extract_strided_slice %3 {offsets = [0, 0], sizes = [16, 1], strides = [1, 1]} : vector<16x2xi32> to vector<16x1xi32>
    %5 = vector.extract_strided_slice %3 {offsets = [0, 1], sizes = [16, 1], strides = [1, 1]} : vector<16x2xi32> to vector<16x1xi32>
    %6 = tpu.iota {dimensions = array<i32: 1>} : vector<16x256xi32>
    %7 = vector.broadcast %4 : vector<16x1xi32> to vector<16x256xi32>
    %8 = arith.cmpi eq, %6, %7 : vector<16x256xi32>
    %9 = arith.extui %8 : vector<16x256xi1> to vector<16x256xi32>
    %10 = arith.sitofp %9 : vector<16x256xi32> to vector<16x256xf32>
    %11 = tpu.iota {dimensions = array<i32: 1>} : vector<16x80xi32>
    %12 = vector.broadcast %5 : vector<16x1xi32> to vector<16x80xi32>
    %13 = arith.cmpi eq, %11, %12 : vector<16x80xi32>
    %14 = arith.extui %13 : vector<16x80xi1> to vector<16x80xi32>
    %15 = arith.sitofp %14 : vector<16x80xi32> to vector<16x80xf32>
    %c0_5 = arith.constant 0 : index
    %c0_6 = arith.constant 0 : index
    %16 = vector.load %arg4[%c0_5, %c0_6] : memref<256x128xf32, #tpu.memory_space<vmem>>, vector<256x128xf32>
    %cst_7 = arith.constant dense<0.000000e+00> : vector<16x128xf32>
    %17 = tpu.matmul %10, %16, %cst_7 {dimension_numbers = #tpu.dot_dimension_numbers<[1], [0], [0], [1], [0, 0, 1, 1], [], []>} : vector<16x256xf32>, vector<256x128xf32>, vector<16x128xf32> -> vector<16x128xf32>
    %18 = arith.addf %2, %17 : vector<16x128xf32>
    %c0_8 = arith.constant 0 : index
    %c0_9 = arith.constant 0 : index
    %19 = vector.load %arg5[%c0_8, %c0_9] : memref<80x128xf32, #tpu.memory_space<vmem>>, vector<80x128xf32>
    %cst_10 = arith.constant dense<0.000000e+00> : vector<16x128xf32>
    %20 = tpu.matmul %15, %19, %cst_10 {dimension_numbers = #tpu.dot_dimension_numbers<[1], [0], [0], [1], [0, 0, 1, 1], [], []>} : vector<16x80xf32>, vector<80x128xf32>, vector<16x128xf32> -> vector<16x128xf32>
    %21 = arith.addf %18, %20 : vector<16x128xf32>
    %c0_11 = arith.constant 0 : index
    %c0_12 = arith.constant 0 : index
    %22 = vector.load %arg6[%c0_11, %c0_12] : memref<1x128xf32, #tpu.memory_space<vmem>>, vector<1x128xf32>
    %23 = vector.broadcast %22 : vector<1x128xf32> to vector<16x128xf32>
    %24 = arith.addf %21, %23 : vector<16x128xf32>
    %cst_13 = arith.constant 0.000000e+00 : f32
    %25 = vector.broadcast %cst_13 : f32 to vector<16x128xf32>
    %26 = arith.maximumf %24, %25 : vector<16x128xf32>
    %c0_14 = arith.constant 0 : index
    %c0_15 = arith.constant 0 : index
    %27 = vector.load %arg7[%c0_14, %c0_15] : memref<128x128xf32, #tpu.memory_space<vmem>>, vector<128x128xf32>
    %cst_16 = arith.constant dense<0.000000e+00> : vector<16x128xf32>
    %28 = tpu.matmul %26, %27, %cst_16 {dimension_numbers = #tpu.dot_dimension_numbers<[1], [0], [0], [1], [0, 0, 1, 1], [], []>} : vector<16x128xf32>, vector<128x128xf32>, vector<16x128xf32> -> vector<16x128xf32>
    %c0_17 = arith.constant 0 : index
    %c0_18 = arith.constant 0 : index
    %29 = vector.load %arg8[%c0_17, %c0_18] : memref<1x128xf32, #tpu.memory_space<vmem>>, vector<1x128xf32>
    %30 = vector.broadcast %29 : vector<1x128xf32> to vector<16x128xf32>
    %31 = arith.addf %28, %30 : vector<16x128xf32>
    %cst_19 = arith.constant 0.000000e+00 : f32
    %32 = vector.broadcast %cst_19 : f32 to vector<16x128xf32>
    %33 = arith.maximumf %31, %32 : vector<16x128xf32>
    %c0_20 = arith.constant 0 : index
    %c0_21 = arith.constant 0 : index
    %34 = vector.load %arg9[%c0_20, %c0_21] : memref<128x64xf32, #tpu.memory_space<vmem>>, vector<128x64xf32>
    %cst_22 = arith.constant dense<0.000000e+00> : vector<16x64xf32>
    %35 = tpu.matmul %33, %34, %cst_22 {dimension_numbers = #tpu.dot_dimension_numbers<[1], [0], [0], [1], [0, 0, 1, 1], [], []>} : vector<16x128xf32>, vector<128x64xf32>, vector<16x64xf32> -> vector<16x64xf32>
    %c0_23 = arith.constant 0 : index
    %c0_24 = arith.constant 0 : index
    %36 = vector.load %arg10[%c0_23, %c0_24] : memref<1x64xf32, #tpu.memory_space<vmem>>, vector<1x64xf32>
    %37 = vector.broadcast %36 : vector<1x64xf32> to vector<16x64xf32>
    %38 = arith.addf %35, %37 : vector<16x64xf32>
    %39 = arith.addf %38, %0 : vector<16x64xf32>
    %c0_25 = arith.constant 0 : index
    %c0_26 = arith.constant 0 : index
    %40 = vector.load %arg11[%c0_25, %c0_26] : memref<16x64xf32, #tpu.memory_space<vmem>>, vector<16x64xf32>
    tpu.vector_store %arg11[%c0_25, %c0_26], %39 {strides = array<i32>} : memref<16x64xf32, #tpu.memory_space<vmem>>, vector<16x64xf32>,
    return
  }
  func.func @transform_0(%arg0: i32) -> (i32, i32) {
    %c0_i32 = arith.constant 0 : i32
    %c0_i32_0 = arith.constant 0 : i32
    return %arg0, %c0_i32 : i32, i32
  }
  func.func @transform_1(%arg0: i32) -> (i32, i32) {
    %c0_i32 = arith.constant 0 : i32
    %c0_i32_0 = arith.constant 0 : i32
    return %arg0, %c0_i32 : i32, i32
  }
  func.func @transform_2(%arg0: i32) -> (i32, i32) {
    %c0_i32 = arith.constant 0 : i32
    %c0_i32_0 = arith.constant 0 : i32
    %c0_i32_1 = arith.constant 0 : i32
    return %c0_i32, %c0_i32_0 : i32, i32
  }
  func.func @transform_3(%arg0: i32) -> (i32, i32) {
    %c0_i32 = arith.constant 0 : i32
    %c0_i32_0 = arith.constant 0 : i32
    %c0_i32_1 = arith.constant 0 : i32
    return %c0_i32, %c0_i32_0 : i32, i32
  }
  func.func @transform_4(%arg0: i32) -> (i32, i32) {
    %c0_i32 = arith.constant 0 : i32
    %c0_i32_0 = arith.constant 0 : i32
    %c0_i32_1 = arith.constant 0 : i32
    return %c0_i32, %c0_i32_0 : i32, i32
  }
  func.func @transform_5(%arg0: i32) -> (i32, i32) {
    %c0_i32 = arith.constant 0 : i32
    %c0_i32_0 = arith.constant 0 : i32
    %c0_i32_1 = arith.constant 0 : i32
    return %c0_i32, %c0_i32_0 : i32, i32
  }
  func.func @transform_6(%arg0: i32) -> (i32, i32) {
    %c0_i32 = arith.constant 0 : i32
    %c0_i32_0 = arith.constant 0 : i32
    %c0_i32_1 = arith.constant 0 : i32
    return %c0_i32, %c0_i32_0 : i32, i32
  }
  func.func @transform_7(%arg0: i32) -> (i32, i32) {
    %c0_i32 = arith.constant 0 : i32
    %c0_i32_0 = arith.constant 0 : i32
    %c0_i32_1 = arith.constant 0 : i32
    return %c0_i32, %c0_i32_0 : i32, i32
  }
  func.func @transform_8(%arg0: i32) -> (i32, i32) {
    %c0_i32 = arith.constant 0 : i32
    %c0_i32_0 = arith.constant 0 : i32
    %c0_i32_1 = arith.constant 0 : i32
    return %c0_i32, %c0_i32_0 : i32, i32
  }
  func.func @transform_9(%arg0: i32) -> (i32, i32) {
    %c0_i32 = arith.constant 0 : i32
    %c0_i32_0 = arith.constant 0 : i32
    %c0_i32_1 = arith.constant 0 : i32
    return %c0_i32, %c0_i32_0 : i32, i32
  }
  func.func @transform_10(%arg0: i32) -> (i32, i32) {
    %c0_i32 = arith.constant 0 : i32
    %c0_i32_0 = arith.constant 0 : i32
    return %arg0, %c0_i32 : i32, i32
  }
}

</mosaic_0001>

<llo_original>
// kernel: neural_network_forward.1
$region0: #{neural_network_forward.1}
  #allocation0 [shape = 'u32[]', space=smem, size = 0x4, offset = 0x4, fixed_abs, tag = 'smem constant byte address 0x4 - core index']
  #allocation1 [shape = 'u32[144,128]{1,0:T(1,128)}', space=vmem, size = 0x12000, scoped, tag = 'internal scratch']
  %s0 = inlined_call_operand.vmem [shape: f32[16,64], index: 0, kind: input, shape index: {}]
  %s1 = inlined_call_operand.vmem [shape: s32[16,2], index: 1, kind: input, shape index: {}]
  %s2 = inlined_call_operand.vmem [shape: f32[64,128], index: 2, kind: input, shape index: {}]
  %s3 = inlined_call_operand.vmem [shape: f32[256,128], index: 3, kind: input, shape index: {}]
  %s4 = inlined_call_operand.vmem [shape: f32[80,128], index: 4, kind: input, shape index: {}]
  %s5 = inlined_call_operand.vmem [shape: f32[1,128], index: 5, kind: input, shape index: {}]
  %s6 = inlined_call_operand.vmem [shape: f32[128,128], index: 6, kind: input, shape index: {}]
  %s7 = inlined_call_operand.vmem [shape: f32[1,128], index: 7, kind: input, shape index: {}]
  %s8 = inlined_call_operand.vmem [shape: f32[128,64], index: 8, kind: input, shape index: {}]
  %s9 = inlined_call_operand.vmem [shape: f32[1,64], index: 9, kind: input, shape index: {}]
  %s10 = inlined_call_operand.hbm [shape: f32[16,64], index: 10, kind: output, shape index: {}]
  %s11 = sld [smem:[#allocation0]]
  $region50: #{neural_network_forward.1} parent=0
    _
  %s13 = ssub.s32 1, %s11
  %s14 = scalar_select 0, %s13, %s11
  $region1: #{neural_network_forward.1} parent=0
    #allocation2 [shape = 'u8[8192]{0}', space=vmem, size = 0x2000, scoped, tag = 'output window, operand 0, single buffered']
    #allocation3 [shape = 's32[1]{0}', space=sflag, size = 0x4, scoped, tag = 'scoped memory for neural_network_forward.1']
    %15 = vsyncpa [#allocation3], 0
    // Predicated region
    $region2: #{neural_network_forward.1} parent=1 // pred_check
      _
    $region3: #{neural_network_forward.1} parent=1 // pred_check_branch
      %17 = sbr.rel (0) target = $region5
    $region4: #{neural_network_forward.1} parent=1 // pred_region
      _
    $region5: #{neural_network_forward.1} parent=1 // pred_fallthru
      _
    // Predicated region
    $region6: #{neural_network_forward.1} parent=1 // pred_check
      _
    $region7: #{neural_network_forward.1} parent=1 // pred_check_branch
      %19 = sbr.rel (0) target = $region9
    $region8: #{neural_network_forward.1} parent=1 // pred_region
      _
    $region9: #{neural_network_forward.1} parent=1 // pred_fallthru
      _
    // Predicated region
    $region10: #{neural_network_forward.1} parent=1 // pred_check
      _
    $region11: #{neural_network_forward.1} parent=1 // pred_check_branch
      %21 = sbr.rel (0) target = $region13
    $region12: #{neural_network_forward.1} parent=1 // pred_region
      _
    $region13: #{neural_network_forward.1} parent=1 // pred_fallthru
      _
    // Predicated region
    $region14: #{neural_network_forward.1} parent=1 // pred_check
      _
    $region15: #{neural_network_forward.1} parent=1 // pred_check_branch
      %23 = sbr.rel (0) target = $region17
    $region16: #{neural_network_forward.1} parent=1 // pred_region
      _
    $region17: #{neural_network_forward.1} parent=1 // pred_fallthru
      _
    // Predicated region
    $region18: #{neural_network_forward.1} parent=1 // pred_check
      _
    $region19: #{neural_network_forward.1} parent=1 // pred_check_branch
      %25 = sbr.rel (0) target = $region21
    $region20: #{neural_network_forward.1} parent=1 // pred_region
      _
    $region21: #{neural_network_forward.1} parent=1 // pred_fallthru
      _
    // Predicated region
    $region22: #{neural_network_forward.1} parent=1 // pred_check
      _
    $region23: #{neural_network_forward.1} parent=1 // pred_check_branch
      %27 = sbr.rel (0) target = $region25
    $region24: #{neural_network_forward.1} parent=1 // pred_region
      _
    $region25: #{neural_network_forward.1} parent=1 // pred_fallthru
      _
    // Predicated region
    $region26: #{neural_network_forward.1} parent=1 // pred_check
      _
    $region27: #{neural_network_forward.1} parent=1 // pred_check_branch
      %29 = sbr.rel (0) target = $region29
    $region28: #{neural_network_forward.1} parent=1 // pred_region
      _
    $region29: #{neural_network_forward.1} parent=1 // pred_fallthru
      _
    // Predicated region
    $region30: #{neural_network_forward.1} parent=1 // pred_check
      _
    $region31: #{neural_network_forward.1} parent=1 // pred_check_branch
      %31 = sbr.rel (0) target = $region33
    $region32: #{neural_network_forward.1} parent=1 // pred_region
      _
    $region33: #{neural_network_forward.1} parent=1 // pred_fallthru
      _
    // Predicated region
    $region34: #{neural_network_forward.1} parent=1 // pred_check
      _
    $region35: #{neural_network_forward.1} parent=1 // pred_check_branch
      %33 = sbr.rel (0) target = $region37
    $region36: #{neural_network_forward.1} parent=1 // pred_region
      _
    $region37: #{neural_network_forward.1} parent=1 // pred_fallthru
      _
    // Predicated region
    $region38: #{neural_network_forward.1} parent=1 // pred_check
      _
    $region39: #{neural_network_forward.1} parent=1 // pred_check_branch
      %35 = sbr.rel (0) target = $region41
    $region40: #{neural_network_forward.1} parent=1 // pred_region
      _
    $region41: #{neural_network_forward.1} parent=1 // pred_fallthru
      _
    %v36 = vld [vmem:[%s0] sm:$0xff]
    %v37 = vld [vmem:[%s0 + $0x8] sm:$0xff]
    %v38 = vld [vmem:[%s2] sm:$0xff]
    %v39 = vld [vmem:[%s2 + $0x8] sm:$0xff]
    %v40 = vld [vmem:[%s2 + $0x10] sm:$0xff]
    %v41 = vld [vmem:[%s2 + $0x18] sm:$0xff]
    %v42 = vld [vmem:[%s2 + $0x20] sm:$0xff]
    %v43 = vld [vmem:[%s2 + $0x28] sm:$0xff]
    %v44 = vld [vmem:[%s2 + $0x30] sm:$0xff]
    %v45 = vld [vmem:[%s2 + $0x38] sm:$0xff]
    %v46 = vld [vmem:[%s1] sm:$0xff]
    %v47 = vld [vmem:[%s1 + $0x8] sm:$0xff]
    %v48 = vlaneseq
    %v49 = vand.u32 %v48, 127
    %v50 = vadd.s32 %v49, 128
    %51 = vset.pattern.permute.xlu0 0
    %52 = vperm.xlu0 %51, %v46
    %v53 = vpop.permute.xlu0 %52
    %54 = vset.pattern.permute.xlu0 0
    %55 = vperm.xlu0 %54, %v47
    %v56 = vpop.permute.xlu0 %55
    %vm57 = vcmp.eq.s32.totalorder %v49, %v53
    %vm58 = vcmp.eq.s32.totalorder %v50, %v53
    %vm59 = vcmp.eq.s32.totalorder %v49, %v56
    %vm60 = vcmp.eq.s32.totalorder %v50, %v56
    %v61 = vsel %vm57, 1, 0
    %v62 = vsel %vm58, 1, 0
    %v63 = vsel %vm59, 1, 0
    %v64 = vsel %vm60, 1, 0
    %v65 = vcvt.s32.f32 %v61
    %v66 = vcvt.s32.f32 %v62
    %v67 = vcvt.s32.f32 %v63
    %v68 = vcvt.s32.f32 %v64
    %69 = vset.pattern.permute.xlu0 1
    %70 = vperm.xlu0 %69, %v46
    %v71 = vpop.permute.xlu0 %70
    %72 = vset.pattern.permute.xlu0 1
    %73 = vperm.xlu0 %72, %v47
    %v74 = vpop.permute.xlu0 %73
    %vm75 = vcmp.eq.s32.totalorder %v49, %v71
    %vm76 = vcmp.eq.s32.totalorder %v49, %v74
    %v77 = vsel %vm75, 1, 0
    %v78 = vsel %vm76, 1, 0
    %v79 = vcvt.s32.f32 %v77
    %v80 = vcvt.s32.f32 %v78
    %v81 = vld [vmem:[%s3] sm:$0xff]
    %v82 = vld [vmem:[%s3 + $0x8] sm:$0xff]
    %v83 = vld [vmem:[%s3 + $0x10] sm:$0xff]
    %v84 = vld [vmem:[%s3 + $0x18] sm:$0xff]
    %v85 = vld [vmem:[%s3 + $0x20] sm:$0xff]
    %v86 = vld [vmem:[%s3 + $0x28] sm:$0xff]
    %v87 = vld [vmem:[%s3 + $0x30] sm:$0xff]
    %v88 = vld [vmem:[%s3 + $0x38] sm:$0xff]
    %v89 = vld [vmem:[%s3 + $0x40] sm:$0xff]
    %v90 = vld [vmem:[%s3 + $0x48] sm:$0xff]
    %v91 = vld [vmem:[%s3 + $0x50] sm:$0xff]
    %v92 = vld [vmem:[%s3 + $0x58] sm:$0xff]
    %v93 = vld [vmem:[%s3 + $0x60] sm:$0xff]
    %v94 = vld [vmem:[%s3 + $0x68] sm:$0xff]
    %v95 = vld [vmem:[%s3 + $0x70] sm:$0xff]
    %v96 = vld [vmem:[%s3 + $0x78] sm:$0xff]
    %v97 = vld [vmem:[%s3 + $0x80] sm:$0xff]
    %v98 = vld [vmem:[%s3 + $0x88] sm:$0xff]
    %v99 = vld [vmem:[%s3 + $0x90] sm:$0xff]
    %v100 = vld [vmem:[%s3 + $0x98] sm:$0xff]
    %v101 = vld [vmem:[%s3 + $0xa0] sm:$0xff]
    %v102 = vld [vmem:[%s3 + $0xa8] sm:$0xff]
    %v103 = vld [vmem:[%s3 + $0xb0] sm:$0xff]
    %v104 = vld [vmem:[%s3 + $0xb8] sm:$0xff]
    %v105 = vld [vmem:[%s3 + $0xc0] sm:$0xff]
    %v106 = vld [vmem:[%s3 + $0xc8] sm:$0xff]
    %v107 = vld [vmem:[%s3 + $0xd0] sm:$0xff]
    %v108 = vld [vmem:[%s3 + $0xd8] sm:$0xff]
    %v109 = vld [vmem:[%s3 + $0xe0] sm:$0xff]
    %v110 = vld [vmem:[%s3 + $0xe8] sm:$0xff]
    %v111 = vld [vmem:[%s3 + $0xf0] sm:$0xff]
    %v112 = vld [vmem:[%s3 + $0xf8] sm:$0xff]
    %113 = vmatprep.subr.mxu0 0.0
    %114 = vmatpush1.msra.mxu0 %v81
    %115 = vmatprep.subr.mxu0 0.0
    %116 = vmatpush1.msra.mxu0 %v82
    %117 = vmatprep.subr.mxu0 0.0
    %118 = vmatpush1.msra.mxu0 %v83
    %119 = vmatprep.subr.mxu0 0.0
    %120 = vmatpush1.msra.mxu0 %v84
    %121 = vmatprep.subr.mxu0 0.0
    %122 = vmatpush1.msra.mxu0 %v85
    %123 = vmatprep.subr.mxu0 0.0
    %124 = vmatpush1.msra.mxu0 %v86
    %125 = vmatprep.subr.mxu0 0.0
    %126 = vmatpush1.msra.mxu0 %v87
    %127 = vmatprep.subr.mxu0 0.0
    %128 = vmatpush1.msra.mxu0 %v88
    %129 = vmatprep.subr.mxu0 0.0
    %130 = vmatpush1.msra.mxu0 %v89
    %131 = vmatprep.subr.mxu0 0.0
    %132 = vmatpush1.msra.mxu0 %v90
    %133 = vmatprep.subr.mxu0 0.0
    %134 = vmatpush1.msra.mxu0 %v91
    %135 = vmatprep.subr.mxu0 0.0
    %136 = vmatpush1.msra.mxu0 %v92
    %137 = vmatprep.subr.mxu0 0.0
    %138 = vmatpush1.msra.mxu0 %v93
    %139 = vmatprep.subr.mxu0 0.0
    %140 = vmatpush1.msra.mxu0 %v94
    %141 = vmatprep.subr.mxu0 0.0
    %142 = vmatpush1.msra.mxu0 %v95
    %143 = vmatprep.subr.mxu0 0.0
    %144 = vmatpush1.msra.mxu0 %v96
    %145 = vmatprep.subr.mxu0 0.0
    %146 = vmatpush1.msra.mxu0 %v97
    %147 = vmatprep.subr.mxu0 0.0
    %148 = vmatpush1.msra.mxu0 %v98
    %149 = vmatprep.subr.mxu0 0.0
    %150 = vmatpush1.msra.mxu0 %v99
    %151 = vmatprep.subr.mxu0 0.0
    %152 = vmatpush1.msra.mxu0 %v100
    %153 = vmatprep.subr.mxu0 0.0
    %154 = vmatpush1.msra.mxu0 %v101
    %155 = vmatprep.subr.mxu0 0.0
    %156 = vmatpush1.msra.mxu0 %v102
    %157 = vmatprep.subr.mxu0 0.0
    %158 = vmatpush1.msra.mxu0 %v103
    %159 = vmatprep.subr.mxu0 0.0
    %160 = vmatpush1.msra.mxu0 %v104
    %161 = vmatprep.subr.mxu0 0.0
    %162 = vmatpush1.msra.mxu0 %v105
    %163 = vmatprep.subr.mxu0 0.0
    %164 = vmatpush1.msra.mxu0 %v106
    %165 = vmatprep.subr.mxu0 0.0
    %166 = vmatpush1.msra.mxu0 %v107
    %167 = vmatprep.subr.mxu0 0.0
    %168 = vmatpush1.msra.mxu0 %v108
    %169 = vmatprep.subr.mxu0 0.0
    %170 = vmatpush1.msra.mxu0 %v109
    %171 = vmatprep.subr.mxu0 0.0
    %172 = vmatpush1.msra.mxu0 %v110
    %173 = vmatprep.subr.mxu0 0.0
    %174 = vmatpush1.msra.mxu0 %v111
    %175 = vmatprep.subr.mxu0 0.0
    %176 = vmatpush1.msra.mxu0 %v112
    %177 = vmatprep.mubr.f32.mxu0 %v66
    %178 = vmatmul.mubr.f32.gmra.mrb[0].mxu0 %v65
    %v179 = vpop.f32.mrb[0].mxu0
    %v180 = vadd.f32 0.0, %v179
    %v181 = vpop.f32.mrb[0].mxu0
    %182 = vmatprep.mubr.f32.mxu0 %v68
    %183 = vmatmul.mubr.f32.gmra.mrb[0].mxu0 %v67
    %v184 = vpop.f32.mrb[0].mxu0
    %v185 = vadd.f32 0.0, %v184
    %v186 = vpop.f32.mrb[0].mxu0
    %187 = vdwg.mxu0
    %vm188 = vcmask 523264
    %v190 = vsel %vm188, %v36, 0
    %v193 = vsel %vm188, %v37, 0
    %195 = vmatprep.subr.mxu0 0.0
    %196 = vmatpush1.msra.mxu0 %v38
    %197 = vmatprep.subr.mxu0 0.0
    %198 = vmatpush1.msra.mxu0 %v39
    %199 = vmatprep.subr.mxu0 0.0
    %200 = vmatpush1.msra.mxu0 %v40
    %201 = vmatprep.subr.mxu0 0.0
    %202 = vmatpush1.msra.mxu0 %v41
    %203 = vmatprep.subr.mxu0 0.0
    %204 = vmatpush1.msra.mxu0 %v42
    %205 = vmatprep.subr.mxu0 0.0
    %206 = vmatpush1.msra.mxu0 %v43
    %207 = vmatprep.subr.mxu0 0.0
    %208 = vmatpush1.msra.mxu0 %v44
    %209 = vmatprep.subr.mxu0 0.0
    %210 = vmatpush1.msra.mxu0 %v45
    %211 = vmatprep.subr.mxu0 0.0
    %212 = vmatpush1.msra.mxu0 0.0
    %213 = vmatprep.subr.mxu0 0.0
    %214 = vmatpush1.msra.mxu0 0.0
    %215 = vmatprep.subr.mxu0 0.0
    %216 = vmatpush1.msra.mxu0 0.0
    %217 = vmatprep.subr.mxu0 0.0
    %218 = vmatpush1.msra.mxu0 0.0
    %219 = vmatprep.subr.mxu0 0.0
    %220 = vmatpush1.msra.mxu0 0.0
    %221 = vmatprep.subr.mxu0 0.0
    %222 = vmatpush1.msra.mxu0 0.0
    %223 = vmatprep.subr.mxu0 0.0
    %224 = vmatpush1.msra.mxu0 0.0
    %225 = vmatprep.subr.mxu0 0.0
    %226 = vmatpush1.msra.mxu0 0.0
    %227 = vmatprep.subr.mxu0 0.0
    %228 = vmatpush1.msra.mxu0 0.0
    %229 = vmatprep.subr.mxu0 0.0
    %230 = vmatpush1.msra.mxu0 0.0
    %231 = vmatprep.subr.mxu0 0.0
    %232 = vmatpush1.msra.mxu0 0.0
    %233 = vmatprep.subr.mxu0 0.0
    %234 = vmatpush1.msra.mxu0 0.0
    %235 = vmatprep.subr.mxu0 0.0
    %236 = vmatpush1.msra.mxu0 0.0
    %237 = vmatprep.subr.mxu0 0.0
    %238 = vmatpush1.msra.mxu0 0.0
    %239 = vmatprep.subr.mxu0 0.0
    %240 = vmatpush1.msra.mxu0 0.0
    %241 = vmatprep.subr.mxu0 0.0
    %242 = vmatpush1.msra.mxu0 0.0
    %243 = vmatprep.subr.mxu0 0.0
    %244 = vmatpush1.msra.mxu0 0.0
    %245 = vmatprep.subr.mxu0 0.0
    %246 = vmatpush1.msra.mxu0 0.0
    %247 = vmatprep.subr.mxu0 0.0
    %248 = vmatpush1.msra.mxu0 0.0
    %249 = vmatprep.subr.mxu0 0.0
    %250 = vmatpush1.msra.mxu0 0.0
    %251 = vmatprep.subr.mxu0 0.0
    %252 = vmatpush1.msra.mxu0 0.0
    %253 = vmatprep.subr.mxu0 0.0
    %254 = vmatpush1.msra.mxu0 0.0
    %255 = vmatprep.subr.mxu0 0.0
    %256 = vmatpush1.msra.mxu0 0.0
    %257 = vmatprep.subr.mxu0 0.0
    %258 = vmatpush1.msra.mxu0 0.0
    %259 = vmatprep.mubr.f32.mxu0 0.0
    %260 = vmatmul.mubr.f32.gmra.mrb[0].mxu0 %v190
    %v261 = vpop.f32.mrb[0].mxu0
    %v262 = vadd.f32 %v180, %v261
    %v263 = vpop.f32.mrb[0].mxu0
    %264 = vmatprep.mubr.f32.mxu0 0.0
    %265 = vmatmul.mubr.f32.gmra.mrb[0].mxu0 %v193
    %v266 = vpop.f32.mrb[0].mxu0
    %v267 = vadd.f32 %v185, %v266
    %v268 = vpop.f32.mrb[0].mxu0
    %269 = vdwg.mxu0
    %v270 = vld [vmem:[%s4] sm:$0xff]
    %v271 = vld [vmem:[%s4 + $0x8] sm:$0xff]
    %v272 = vld [vmem:[%s4 + $0x10] sm:$0xff]
    %v273 = vld [vmem:[%s4 + $0x18] sm:$0xff]
    %v274 = vld [vmem:[%s4 + $0x20] sm:$0xff]
    %v275 = vld [vmem:[%s4 + $0x28] sm:$0xff]
    %v276 = vld [vmem:[%s4 + $0x30] sm:$0xff]
    %v277 = vld [vmem:[%s4 + $0x38] sm:$0xff]
    %v278 = vld [vmem:[%s4 + $0x40] sm:$0xff]
    %v279 = vld [vmem:[%s4 + $0x48] sm:$0xff]
    %vm280 = vcmask 654336
    %v282 = vsel %vm280, %v79, 0
    %v285 = vsel %vm280, %v80, 0
    %287 = vmatprep.subr.mxu0 0.0
    %288 = vmatpush1.msra.mxu0 %v270
    %289 = vmatprep.subr.mxu0 0.0
    %290 = vmatpush1.msra.mxu0 %v271
    %291 = vmatprep.subr.mxu0 0.0
    %292 = vmatpush1.msra.mxu0 %v272
    %293 = vmatprep.subr.mxu0 0.0
    %294 = vmatpush1.msra.mxu0 %v273
    %295 = vmatprep.subr.mxu0 0.0
    %296 = vmatpush1.msra.mxu0 %v274
    %297 = vmatprep.subr.mxu0 0.0
    %298 = vmatpush1.msra.mxu0 %v275
    %299 = vmatprep.subr.mxu0 0.0
    %300 = vmatpush1.msra.mxu0 %v276
    %301 = vmatprep.subr.mxu0 0.0
    %302 = vmatpush1.msra.mxu0 %v277
    %303 = vmatprep.subr.mxu0 0.0
    %304 = vmatpush1.msra.mxu0 %v278
    %305 = vmatprep.subr.mxu0 0.0
    %306 = vmatpush1.msra.mxu0 %v279
    %307 = vmatprep.subr.mxu0 0.0
    %308 = vmatpush1.msra.mxu0 0.0
    %309 = vmatprep.subr.mxu0 0.0
    %310 = vmatpush1.msra.mxu0 0.0
    %311 = vmatprep.subr.mxu0 0.0
    %312 = vmatpush1.msra.mxu0 0.0
    %313 = vmatprep.subr.mxu0 0.0
    %314 = vmatpush1.msra.mxu0 0.0
    %315 = vmatprep.subr.mxu0 0.0
    %316 = vmatpush1.msra.mxu0 0.0
    %317 = vmatprep.subr.mxu0 0.0
    %318 = vmatpush1.msra.mxu0 0.0
    %319 = vmatprep.subr.mxu0 0.0
    %320 = vmatpush1.msra.mxu0 0.0
    %321 = vmatprep.subr.mxu0 0.0
    %322 = vmatpush1.msra.mxu0 0.0
    %323 = vmatprep.subr.mxu0 0.0
    %324 = vmatpush1.msra.mxu0 0.0
    %325 = vmatprep.subr.mxu0 0.0
    %326 = vmatpush1.msra.mxu0 0.0
    %327 = vmatprep.subr.mxu0 0.0
    %328 = vmatpush1.msra.mxu0 0.0
    %329 = vmatprep.subr.mxu0 0.0
    %330 = vmatpush1.msra.mxu0 0.0
    %331 = vmatprep.subr.mxu0 0.0
    %332 = vmatpush1.msra.mxu0 0.0
    %333 = vmatprep.subr.mxu0 0.0
    %334 = vmatpush1.msra.mxu0 0.0
    %335 = vmatprep.subr.mxu0 0.0
    %336 = vmatpush1.msra.mxu0 0.0
    %337 = vmatprep.subr.mxu0 0.0
    %338 = vmatpush1.msra.mxu0 0.0
    %339 = vmatprep.subr.mxu0 0.0
    %340 = vmatpush1.msra.mxu0 0.0
    %341 = vmatprep.subr.mxu0 0.0
    %342 = vmatpush1.msra.mxu0 0.0
    %343 = vmatprep.subr.mxu0 0.0
    %344 = vmatpush1.msra.mxu0 0.0
    %345 = vmatprep.subr.mxu0 0.0
    %346 = vmatpush1.msra.mxu0 0.0
    %347 = vmatprep.subr.mxu0 0.0
    %348 = vmatpush1.msra.mxu0 0.0
    %349 = vmatprep.subr.mxu0 0.0
    %350 = vmatpush1.msra.mxu0 0.0
    %351 = vmatprep.mubr.f32.mxu0 0.0
    %352 = vmatmul.mubr.f32.gmra.mrb[0].mxu0 %v282
    %v353 = vpop.f32.mrb[0].mxu0
    %v354 = vadd.f32 0.0, %v353
    %v355 = vpop.f32.mrb[0].mxu0
    %356 = vmatprep.mubr.f32.mxu0 0.0
    %357 = vmatmul.mubr.f32.gmra.mrb[0].mxu0 %v285
    %v358 = vpop.f32.mrb[0].mxu0
    %v359 = vadd.f32 0.0, %v358
    %v360 = vpop.f32.mrb[0].mxu0
    %361 = vdwg.mxu0
    %v362 = vadd.f32 %v262, %v354
    %v363 = vadd.f32 %v267, %v359
    %v364 = vld [vmem:[%s5] sm:$0x1]
    %v366 = vlaneseq
    %v367 = vshrl.u32 %v366, 7
    %v368 = vsub.s32 0, %v367
    %v369 = vrot.slane %v364, %v368
    %v371 = vadd.f32 %v362, %v369
    %v372 = vadd.f32 %v363, %v369
    %v373 = vmax.f32 %v371, 0.0
    %v374 = vmax.f32 %v372, 0.0
    %v375 = vld [vmem:[%s6] sm:$0xff]
    %v376 = vld [vmem:[%s6 + $0x8] sm:$0xff]
    %v377 = vld [vmem:[%s6 + $0x10] sm:$0xff]
    %v378 = vld [vmem:[%s6 + $0x18] sm:$0xff]
    %v379 = vld [vmem:[%s6 + $0x20] sm:$0xff]
    %v380 = vld [vmem:[%s6 + $0x28] sm:$0xff]
    %v381 = vld [vmem:[%s6 + $0x30] sm:$0xff]
    %v382 = vld [vmem:[%s6 + $0x38] sm:$0xff]
    %v383 = vld [vmem:[%s6 + $0x40] sm:$0xff]
    %v384 = vld [vmem:[%s6 + $0x48] sm:$0xff]
    %v385 = vld [vmem:[%s6 + $0x50] sm:$0xff]
    %v386 = vld [vmem:[%s6 + $0x58] sm:$0xff]
    %v387 = vld [vmem:[%s6 + $0x60] sm:$0xff]
    %v388 = vld [vmem:[%s6 + $0x68] sm:$0xff]
    %v389 = vld [vmem:[%s6 + $0x70] sm:$0xff]
    %v390 = vld [vmem:[%s6 + $0x78] sm:$0xff]
    %v391 = vld [vmem:[%s7] sm:$0x1]
    %v393 = vlaneseq
    %v394 = vshrl.u32 %v393, 7
    %v395 = vsub.s32 0, %v394
    %v396 = vrot.slane %v391, %v395
    %398 = vmatprep.subr.mxu0 0.0
    %399 = vmatpush1.msra.mxu0 %v375
    %400 = vmatprep.subr.mxu0 0.0
    %401 = vmatpush1.msra.mxu0 %v376
    %402 = vmatprep.subr.mxu0 0.0
    %403 = vmatpush1.msra.mxu0 %v377
    %404 = vmatprep.subr.mxu0 0.0
    %405 = vmatpush1.msra.mxu0 %v378
    %406 = vmatprep.subr.mxu0 0.0
    %407 = vmatpush1.msra.mxu0 %v379
    %408 = vmatprep.subr.mxu0 0.0
    %409 = vmatpush1.msra.mxu0 %v380
    %410 = vmatprep.subr.mxu0 0.0
    %411 = vmatpush1.msra.mxu0 %v381
    %412 = vmatprep.subr.mxu0 0.0
    %413 = vmatpush1.msra.mxu0 %v382
    %414 = vmatprep.subr.mxu0 0.0
    %415 = vmatpush1.msra.mxu0 %v383
    %416 = vmatprep.subr.mxu0 0.0
    %417 = vmatpush1.msra.mxu0 %v384
    %418 = vmatprep.subr.mxu0 0.0
    %419 = vmatpush1.msra.mxu0 %v385
    %420 = vmatprep.subr.mxu0 0.0
    %421 = vmatpush1.msra.mxu0 %v386
    %422 = vmatprep.subr.mxu0 0.0
    %423 = vmatpush1.msra.mxu0 %v387
    %424 = vmatprep.subr.mxu0 0.0
    %425 = vmatpush1.msra.mxu0 %v388
    %426 = vmatprep.subr.mxu0 0.0
    %427 = vmatpush1.msra.mxu0 %v389
    %428 = vmatprep.subr.mxu0 0.0
    %429 = vmatpush1.msra.mxu0 %v390
    %430 = vmatprep.subr.mxu0 0.0
    %431 = vmatpush1.msra.mxu0 0.0
    %432 = vmatprep.subr.mxu0 0.0
    %433 = vmatpush1.msra.mxu0 0.0
    %434 = vmatprep.subr.mxu0 0.0
    %435 = vmatpush1.msra.mxu0 0.0
    %436 = vmatprep.subr.mxu0 0.0
    %437 = vmatpush1.msra.mxu0 0.0
    %438 = vmatprep.subr.mxu0 0.0
    %439 = vmatpush1.msra.mxu0 0.0
    %440 = vmatprep.subr.mxu0 0.0
    %441 = vmatpush1.msra.mxu0 0.0
    %442 = vmatprep.subr.mxu0 0.0
    %443 = vmatpush1.msra.mxu0 0.0
    %444 = vmatprep.subr.mxu0 0.0
    %445 = vmatpush1.msra.mxu0 0.0
    %446 = vmatprep.subr.mxu0 0.0
    %447 = vmatpush1.msra.mxu0 0.0
    %448 = vmatprep.subr.mxu0 0.0
    %449 = vmatpush1.msra.mxu0 0.0
    %450 = vmatprep.subr.mxu0 0.0
    %451 = vmatpush1.msra.mxu0 0.0
    %452 = vmatprep.subr.mxu0 0.0
    %453 = vmatpush1.msra.mxu0 0.0
    %454 = vmatprep.subr.mxu0 0.0
    %455 = vmatpush1.msra.mxu0 0.0
    %456 = vmatprep.subr.mxu0 0.0
    %457 = vmatpush1.msra.mxu0 0.0
    %458 = vmatprep.subr.mxu0 0.0
    %459 = vmatpush1.msra.mxu0 0.0
    %460 = vmatprep.subr.mxu0 0.0
    %461 = vmatpush1.msra.mxu0 0.0
    %462 = vmatprep.mubr.f32.mxu0 0.0
    %463 = vmatmul.mubr.f32.gmra.mrb[0].mxu0 %v373
    %v464 = vpop.f32.mrb[0].mxu0
    %v465 = vadd.f32 %v396, %v464
    %v466 = vpop.f32.mrb[0].mxu0
    %467 = vmatprep.mubr.f32.mxu0 0.0
    %468 = vmatmul.mubr.f32.gmra.mrb[0].mxu0 %v374
    %v469 = vpop.f32.mrb[0].mxu0
    %v470 = vadd.f32 %v396, %v469
    %v471 = vpop.f32.mrb[0].mxu0
    %472 = vdwg.mxu0
    %v473 = vmax.f32 %v465, 0.0
    %v474 = vmax.f32 %v470, 0.0
    %v475 = vld [vmem:[%s8] sm:$0xff]
    %v476 = vld [vmem:[%s8 + $0x8] sm:$0xff]
    %v477 = vld [vmem:[%s8 + $0x10] sm:$0xff]
    %v478 = vld [vmem:[%s8 + $0x18] sm:$0xff]
    %v479 = vld [vmem:[%s8 + $0x20] sm:$0xff]
    %v480 = vld [vmem:[%s8 + $0x28] sm:$0xff]
    %v481 = vld [vmem:[%s8 + $0x30] sm:$0xff]
    %v482 = vld [vmem:[%s8 + $0x38] sm:$0xff]
    %v483 = vld [vmem:[%s8 + $0x40] sm:$0xff]
    %v484 = vld [vmem:[%s8 + $0x48] sm:$0xff]
    %v485 = vld [vmem:[%s8 + $0x50] sm:$0xff]
    %v486 = vld [vmem:[%s8 + $0x58] sm:$0xff]
    %v487 = vld [vmem:[%s8 + $0x60] sm:$0xff]
    %v488 = vld [vmem:[%s8 + $0x68] sm:$0xff]
    %v489 = vld [vmem:[%s8 + $0x70] sm:$0xff]
    %v490 = vld [vmem:[%s8 + $0x78] sm:$0xff]
    %v491 = vld [vmem:[%s9] sm:$0x1]
    %v493 = vlaneseq
    %v494 = vshrl.u32 %v493, 7
    %v495 = vsub.s32 0, %v494
    %v496 = vrot.slane %v491, %v495
    %498 = vmatprep.subr.mxu0 0.0
    %499 = vmatpush1.msra.mxu0 %v475
    %500 = vmatprep.subr.mxu0 0.0
    %501 = vmatpush1.msra.mxu0 %v476
    %502 = vmatprep.subr.mxu0 0.0
    %503 = vmatpush1.msra.mxu0 %v477
    %504 = vmatprep.subr.mxu0 0.0
    %505 = vmatpush1.msra.mxu0 %v478
    %506 = vmatprep.subr.mxu0 0.0
    %507 = vmatpush1.msra.mxu0 %v479
    %508 = vmatprep.subr.mxu0 0.0
    %509 = vmatpush1.msra.mxu0 %v480
    %510 = vmatprep.subr.mxu0 0.0
    %511 = vmatpush1.msra.mxu0 %v481
    %512 = vmatprep.subr.mxu0 0.0
    %513 = vmatpush1.msra.mxu0 %v482
    %514 = vmatprep.subr.mxu0 0.0
    %515 = vmatpush1.msra.mxu0 %v483
    %516 = vmatprep.subr.mxu0 0.0
    %517 = vmatpush1.msra.mxu0 %v484
    %518 = vmatprep.subr.mxu0 0.0
    %519 = vmatpush1.msra.mxu0 %v485
    %520 = vmatprep.subr.mxu0 0.0
    %521 = vmatpush1.msra.mxu0 %v486
    %522 = vmatprep.subr.mxu0 0.0
    %523 = vmatpush1.msra.mxu0 %v487
    %524 = vmatprep.subr.mxu0 0.0
    %525 = vmatpush1.msra.mxu0 %v488
    %526 = vmatprep.subr.mxu0 0.0
    %527 = vmatpush1.msra.mxu0 %v489
    %528 = vmatprep.subr.mxu0 0.0
    %529 = vmatpush1.msra.mxu0 %v490
    %530 = vmatprep.subr.mxu0 0.0
    %531 = vmatpush1.msra.mxu0 0.0
    %532 = vmatprep.subr.mxu0 0.0
    %533 = vmatpush1.msra.mxu0 0.0
    %534 = vmatprep.subr.mxu0 0.0
    %535 = vmatpush1.msra.mxu0 0.0
    %536 = vmatprep.subr.mxu0 0.0
    %537 = vmatpush1.msra.mxu0 0.0
    %538 = vmatprep.subr.mxu0 0.0
    %539 = vmatpush1.msra.mxu0 0.0
    %540 = vmatprep.subr.mxu0 0.0
    %541 = vmatpush1.msra.mxu0 0.0
    %542 = vmatprep.subr.mxu0 0.0
    %543 = vmatpush1.msra.mxu0 0.0
    %544 = vmatprep.subr.mxu0 0.0
    %545 = vmatpush1.msra.mxu0 0.0
    %546 = vmatprep.subr.mxu0 0.0
    %547 = vmatpush1.msra.mxu0 0.0
    %548 = vmatprep.subr.mxu0 0.0
    %549 = vmatpush1.msra.mxu0 0.0
    %550 = vmatprep.subr.mxu0 0.0
    %551 = vmatpush1.msra.mxu0 0.0
    %552 = vmatprep.subr.mxu0 0.0
    %553 = vmatpush1.msra.mxu0 0.0
    %554 = vmatprep.subr.mxu0 0.0
    %555 = vmatpush1.msra.mxu0 0.0
    %556 = vmatprep.subr.mxu0 0.0
    %557 = vmatpush1.msra.mxu0 0.0
    %558 = vmatprep.subr.mxu0 0.0
    %559 = vmatpush1.msra.mxu0 0.0
    %560 = vmatprep.subr.mxu0 0.0
    %561 = vmatpush1.msra.mxu0 0.0
    %562 = vmatprep.mubr.f32.mxu0 0.0
    %563 = vmatmul.mubr.f32.gmra.mrb[0].mxu0 %v473
    %v564 = vpop.f32.mrb[0].mxu0
    %v565 = vadd.f32 %v496, %v564
    %v566 = vpop.f32.mrb[0].mxu0
    %567 = vmatprep.mubr.f32.mxu0 0.0
    %568 = vmatmul.mubr.f32.gmra.mrb[0].mxu0 %v474
    %v569 = vpop.f32.mrb[0].mxu0
    %v570 = vadd.f32 %v496, %v569
    %v571 = vpop.f32.mrb[0].mxu0
    %572 = vdwg.mxu0
    %v573 = vadd.f32 %v565, %v36
    %v574 = vadd.f32 %v570, %v37
    %575 = vst.msk [vmem:[#allocation2] sm:$0xff] %vm188, %v573
    %576 = vst.msk [vmem:[#allocation2 + $0x8] sm:$0xff] %vm188, %v574
    // Predicated region
    $region42: #{neural_network_forward.1} parent=1 // pred_check
      _
    $region43: #{neural_network_forward.1} parent=1 // pred_check_branch
      %578 = sbr.rel (0) target = $region45
    $region44: #{neural_network_forward.1} parent=1 // pred_region
      %s580 = ssub.s32 256, 256
      %581 = vsyncadd [#allocation3], %s580
      %s582 = sshll.u32 [#allocation2], 4
      %s583 = int_to_ptr.vmem [resolvable:$true] %s582
      %588 = dma.vmem_to_hbm [thread:$0]  %s583, 256, %s10, [#allocation3], 128, 128, 8
    $region45: #{neural_network_forward.1} parent=1 // pred_fallthru
      _
    // Predicated region
    $region46: #{neural_network_forward.1} parent=1 // pred_check
      _
    $region47: #{neural_network_forward.1} parent=1 // pred_check_branch
      %590 = sbr.rel (0) target = $region49
    $region48: #{neural_network_forward.1} parent=1 // pred_region
      %591 = dma.done [#allocation3], 256
    $region49: #{neural_network_forward.1} parent=1 // pred_fallthru
      _
    %592 = vsyncpa [#allocation3], 1

</llo_original>
